<compile_context>
chip_gen: v6e
topology: v6e:2x2x1
jax: 0.10.0
libtpu: 0.0.40
codegen_flags: <defaults>
</compile_context>

<pallas_src>
import math

import jax
import jax.numpy as jnp
from jax.experimental import pallas as pl
from jax.experimental.pallas import tpu as pltpu

_TILE_BYTES = 8 * 1024 * 1024          # per-buffer tile budget (~8 MiB)
_VMEM_LIMIT_BYTES = 48 * 1024 * 1024   # 4 buffers ~32 MiB + headroom; fits v7x
_ROW_ALIGN = 32                        # sublane granularity good for f32/bf16/i8
_MIN_GRID_STEPS = 4                    # keep the pipeline busy on mid-size inputs
_MIN_PALLAS_BYTES = 256 * 1024         # below this, fused XLA wins


def _round_up(n, m):
    return ((n + m - 1) // m) * m


def _make_kernel(pos_scale, neg_scale):
    def kernel(x_ref, o_ref):
        x = x_ref[...]
        scale = jnp.where(
            x >= 0,
            jnp.asarray(pos_scale, x.dtype),
            jnp.asarray(neg_scale, x.dtype),
        )
        o_ref[...] = (x * scale).astype(o_ref.dtype)

    return kernel


def scaled_leaky_relu(x, negative_slope=0.2, *, min_pallas_bytes=_MIN_PALLAS_BYTES):
    """leaky_relu(x, negative_slope) * sqrt(2), elementwise."""
    assert jnp.issubdtype(x.dtype, jnp.floating), "scaled_leaky_relu expects a floating dtype"

    orig_shape = x.shape
    total = x.size
    itemsize = jnp.dtype(x.dtype).itemsize
    pos_scale = math.sqrt(2.0)
    neg_scale = float(negative_slope) * math.sqrt(2.0)

    # Tiny inputs: let XLA fuse it; pallas_call fixed overhead would dominate.
    if total == 0 or total * itemsize < min_pallas_bytes:
        return x * jnp.where(
            x >= 0, jnp.asarray(pos_scale, x.dtype), jnp.asarray(neg_scale, x.dtype)
        )

    # Pick the widest lane-dense last dim that needs NO padding (zero-copy
    # reshape). Prefer choices with at least 8 rows; fall back otherwise.
    lanes = None
    for cand in (512, 256, 128):
        if total % cand == 0 and total // cand >= 8:
            lanes = cand
            break
    if lanes is None:
        for cand in (512, 256, 128):
            if total % cand == 0:
                lanes = cand
                break
    needs_pad = lanes is None
    if needs_pad:
        lanes = 128  # minimizes padded volume

    rows = pl.cdiv(total, lanes)
    if needs_pad:
        # Minimal, sublane-friendly padding only (NOT up to tile_rows).
        rows = _round_up(rows, _ROW_ALIGN)
    padded_total = rows * lanes

    flat = x.reshape(-1)
    if needs_pad:
        flat = jnp.pad(flat, (0, padded_total - total))
    x2d = flat.reshape(rows, lanes)

    # Tile rows: per-buffer byte budget, >= _MIN_GRID_STEPS steps when there is
    # enough work, 32-row granularity, never (much) larger than the array.
    tr_budget = max(_ROW_ALIGN, (_TILE_BYTES // (lanes * itemsize)) // _ROW_ALIGN * _ROW_ALIGN)
    tr_split = max(_ROW_ALIGN, _round_up(pl.cdiv(rows, _MIN_GRID_STEPS), _ROW_ALIGN))
    tile_rows = min(tr_budget, tr_split, _round_up(rows, 8))

    grid = (pl.cdiv(rows, tile_rows),)
    kernel = _make_kernel(pos_scale, neg_scale)

    out2d = pl.pallas_call(
        kernel,
        out_shape=jax.ShapeDtypeStruct((rows, lanes), x.dtype),
        grid=grid,
        in_specs=[pl.BlockSpec((tile_rows, lanes), lambda i: (i, 0))],
        out_specs=pl.BlockSpec((tile_rows, lanes), lambda i: (i, 0)),
        compiler_params=pltpu.CompilerParams(
            dimension_semantics=("parallel",),   # shard rows across v7x's 2 TCs
            vmem_limit_bytes=_VMEM_LIMIT_BYTES,  # explicit: above v5e default, fits v7x
        ),
        cost_estimate=pl.CostEstimate(
            flops=2 * padded_total,              # compare + multiply per element
            transcendentals=0,
            bytes_accessed=2 * padded_total * itemsize,
        ),
    )(x2d)

    out_flat = out2d.reshape(-1)
    if needs_pad:
        out_flat = out_flat[:total]
    return out_flat.reshape(orig_shape)


if __name__ == "__main__":
    key0, key1 = jax.random.split(jax.random.PRNGKey(0))
    slope = 0.2
    sqrt2 = math.sqrt(2.0)

    def ref_fn(v):
        return jnp.where(v >= 0, v, slope * v) * jnp.asarray(sqrt2, v.dtype)

    # Typical small NCHW conv-feature input (batch=2, channels=4, H=W=16).
    x = jax.random.normal(key0, (2, 4, 16, 16), dtype=jnp.float32)

    # Default path: this 8 KiB input is routed to the fused-XLA fast path.
    out_small = jax.block_until_ready(scaled_leaky_relu(x, slope))
    assert out_small.shape == x.shape and out_small.dtype == x.dtype
    assert jnp.allclose(out_small, ref_fn(x), atol=1e-6, rtol=1e-5)

    # Force the Pallas kernel on the same input (zero-copy lane-dense path).
    out_pallas = jax.block_until_ready(scaled_leaky_relu(x, slope, min_pallas_bytes=0))
    assert out_pallas.shape == x.shape and out_pallas.dtype == x.dtype
    assert jnp.allclose(out_pallas, ref_fn(x), atol=1e-6, rtol=1e-5)

    # Ragged shape exercising the (minimal) padding + masked-last-block path.
    y = jax.random.normal(key1, (3, 5, 7, 11), dtype=jnp.float32)
    out_ragged = jax.block_until_ready(scaled_leaky_relu(y, slope, min_pallas_bytes=0))
    assert out_ragged.shape == y.shape and out_ragged.dtype == y.dtype
    assert jnp.allclose(out_ragged, ref_fn(y), atol=1e-6, rtol=1e-5)

    print("KERNEL_OK")
</pallas_src>

<mosaic_0001>
module attributes {stable_mosaic.version = 11 : i64} {
  func.func @kernel(%arg0: i32, %arg1: memref<8x256xf32, #tpu.memory_space<vmem>>, %arg2: memref<8x256xf32, #tpu.memory_space<vmem>>) attributes {dimension_semantics = [#tpu.dimension_semantics<parallel>], iteration_bounds = array<i64: 1>, scalar_prefetch = 0 : i64, scratch_operands = 0 : i64, tpu.core_type = #tpu.core_type<tc>, window_params = [{transform_indices = @transform_0, window_bounds = array<i64: 8, 256>}, {transform_indices = @transform_1, window_bounds = array<i64: 8, 256>}]} {
    %c0 = arith.constant 0 : index
    %c0_0 = arith.constant 0 : index
    %0 = vector.load %arg1[%c0, %c0_0] : memref<8x256xf32, #tpu.memory_space<vmem>>, vector<8x256xf32>
    %cst = arith.constant 0.000000e+00 : f32
    %1 = vector.broadcast %cst : f32 to vector<8x256xf32>
    %2 = arith.cmpf oge, %0, %1 : vector<8x256xf32>
    %cst_1 = arith.constant 1.41421354 : f32
    %cst_2 = arith.constant 0.282842726 : f32
    %3 = vector.broadcast %cst_1 : f32 to vector<8x256xf32>
    %4 = vector.broadcast %cst_2 : f32 to vector<8x256xf32>
    %5 = arith.select %2, %3, %4 : vector<8x256xi1>, vector<8x256xf32>
    %6 = arith.mulf %0, %5 : vector<8x256xf32>
    %c0_3 = arith.constant 0 : index
    %c0_4 = arith.constant 0 : index
    %7 = vector.load %arg2[%c0_3, %c0_4] : memref<8x256xf32, #tpu.memory_space<vmem>>, vector<8x256xf32>
    tpu.vector_store %arg2[%c0_3, %c0_4], %6 {strides = array<i32>} : memref<8x256xf32, #tpu.memory_space<vmem>>, vector<8x256xf32>,
    return
  }
  func.func @transform_0(%arg0: i32) -> (i32, i32) {
    %c0_i32 = arith.constant 0 : i32
    %c0_i32_0 = arith.constant 0 : i32
    return %arg0, %c0_i32 : i32, i32
  }
  func.func @transform_1(%arg0: i32) -> (i32, i32) {
    %c0_i32 = arith.constant 0 : i32
    %c0_i32_0 = arith.constant 0 : i32
    return %arg0, %c0_i32 : i32, i32
  }
}

</mosaic_0001>

<llo_original>
// kernel: tpu_custom_call.1
$region0: #{tpu_custom_call.1}
  #allocation0 [shape = 'u32[]', space=smem, size = 0x4, offset = 0x4, fixed_abs, tag = 'smem constant byte address 0x4 - core index']
  #allocation1 [shape = 'u32[144,128]{1,0:T(1,128)}', space=vmem, size = 0x12000, scoped, tag = 'internal scratch']
  %s0 = inlined_call_operand.hbm [shape: f32[8,256], index: 0, kind: input, shape index: {}]
  %s1 = inlined_call_operand.hbm [shape: f32[8,256], index: 1, kind: output, shape index: {}]
  %s2 = sld [smem:[#allocation0]]
  $region18: #{tpu_custom_call.1} parent=0
    _
  %s4 = ssub.s32 1, %s2
  %s5 = scalar_select 0, %s4, %s2
  $region1: #{tpu_custom_call.1} parent=0
    #allocation2 [shape = 'u8[8192]{0}', space=vmem, size = 0x2000, scoped, tag = 'input window, operand 0, single buffered']
    #allocation3 [shape = 's32[1]{0}', space=sflag, size = 0x4, scoped, tag = 'scoped memory for tpu_custom_call.1']
    #allocation4 [shape = 's32[1]{0}', space=sflag, size = 0x4, scoped, tag = 'scoped memory for tpu_custom_call.1']
    #allocation5 [shape = 'u8[8192]{0}', space=vmem, size = 0x2000, scoped, tag = 'output window, operand 0, single buffered']
    %6 = vsyncpa [#allocation3], 0
    %7 = vsyncpa [#allocation4], 0
    // Predicated region
    $region2: #{tpu_custom_call.1} parent=1 // pred_check
      _
    $region3: #{tpu_custom_call.1} parent=1 // pred_check_branch
      %9 = sbr.rel (0) target = $region5
    $region4: #{tpu_custom_call.1} parent=1 // pred_region
      %s11 = ssub.s32 256, 256
      %12 = vsyncadd [#allocation3], %s11
      %s14 = sshll.u32 [#allocation2], 4
      %s15 = int_to_ptr.vmem [resolvable:$true] %s14
      %17 = dma.hbm_to_vmem [thread:$0]  %s0, 256, %s15, [#allocation3]
    $region5: #{tpu_custom_call.1} parent=1 // pred_fallthru
      _
    // Predicated region
    $region6: #{tpu_custom_call.1} parent=1 // pred_check
      _
    $region7: #{tpu_custom_call.1} parent=1 // pred_check_branch
      %19 = sbr.rel (0) target = $region9
    $region8: #{tpu_custom_call.1} parent=1 // pred_region
      %20 = dma.done [#allocation3], 256
    $region9: #{tpu_custom_call.1} parent=1 // pred_fallthru
      _
    %v21 = vld [vmem:[#allocation2] sm:$0xff]
    %v22 = vld [vmem:[#allocation2 + $0x8] sm:$0xff]
    %vm23 = vcmp.ge.f32.partialorder %v21, 0.0
    %vm24 = vcmp.ge.f32.partialorder %v22, 0.0
    %v25 = vsel %vm23, 1.4142135, 0.28284273
    %v26 = vsel %vm24, 1.4142135, 0.28284273
    %v27 = vmul.f32 %v21, %v25
    %v28 = vmul.f32 %v22, %v26
    %29 = vst [vmem:[#allocation5] sm:$0xff] %v27
    %30 = vst [vmem:[#allocation5 + $0x8] sm:$0xff] %v28
    // Predicated region
    $region10: #{tpu_custom_call.1} parent=1 // pred_check
      _
    $region11: #{tpu_custom_call.1} parent=1 // pred_check_branch
      %32 = sbr.rel (0) target = $region13
    $region12: #{tpu_custom_call.1} parent=1 // pred_region
      %s34 = ssub.s32 256, 256
      %35 = vsyncadd [#allocation4], %s34
      %s37 = sshll.u32 [#allocation5], 4
      %s38 = int_to_ptr.vmem [resolvable:$true] %s37
      %40 = dma.vmem_to_hbm [thread:$0]  %s38, 256, %s1, [#allocation4]
    $region13: #{tpu_custom_call.1} parent=1 // pred_fallthru
      _
    // Predicated region
    $region14: #{tpu_custom_call.1} parent=1 // pred_check
      _
    $region15: #{tpu_custom_call.1} parent=1 // pred_check_branch
      %42 = sbr.rel (0) target = $region17
    $region16: #{tpu_custom_call.1} parent=1 // pred_region
      %43 = dma.done [#allocation4], 256
    $region17: #{tpu_custom_call.1} parent=1 // pred_fallthru
      _
    %44 = vsyncpa [#allocation3], 1
    %45 = vsyncpa [#allocation4], 1

</llo_original>
